<compile_context>
chip_gen: v5e
topology: v5e:2x2
jax: 0.10.0
libtpu: 0.0.40
codegen_flags: <defaults>
</compile_context>

<pallas_src>
import functools
import math

import jax
import jax.numpy as jnp
import numpy as np
from jax import lax
from jax.experimental import pallas as pl
from jax.experimental.pallas import tpu as pltpu

# Finite "-inf": avoids inf-inf NaNs.  Safe because the diagonal kv tile is
# always processed, so every row's running max becomes finite before use.
_NEG_INF = -1e30


def _vmem_limit_bytes():
    # ~3/4 of physical VMEM: ~96 MiB on 128 MiB parts (v5e/v6e), 48 MiB on
    # v7x's 64 MiB.  Conservative fallback if the query is unavailable.
    try:
        cap = pltpu.get_tpu_info().vmem_capacity_bytes
        return int(max(cap - (32 << 20), (cap * 3) // 4))
    except Exception:
        return 48 << 20


# ---------------------------------------------------------------------------
# kernel 1: fused QKV projection, emits q/k/v as [B, H, T, hd]
# ---------------------------------------------------------------------------
def _qkv_kernel(x_ref, w_ref, b_ref, q_ref, k_ref, v_ref, *, n_head, scale):
    C = x_ref.shape[-1]
    hd = C // n_head
    x = x_ref[0]                                                    # (tx, C) bf16
    # One big MXU call (N = 3C) instead of three, f32 accumulation + f32 bias.
    z = jnp.dot(x, w_ref[...], preferred_element_type=jnp.float32) + b_ref[...]
    # Scatter each head into [H, tx, hd] so kernel 2 consumes [B, H, T, hd]
    # directly (no HBM-level transpose between the two kernels).  The
    # 1/sqrt(hd) scale is folded into q here (rounding differs negligibly from
    # scaling f32 scores; covered by the bf16 tolerance).
    for h in range(n_head):
        q_ref[0, h] = (z[:, h * hd:(h + 1) * hd] * scale).astype(q_ref.dtype)
        k_ref[0, h] = z[:, C + h * hd:C + (h + 1) * hd].astype(k_ref.dtype)
        v_ref[0, h] = z[:, 2 * C + h * hd:2 * C + (h + 1) * hd].astype(v_ref.dtype)
    # TODO(synk): for very large C on v7x (64 MiB VMEM), tile the weight N
    # dimension with an extra grid axis instead of keeping (C,3C) resident.


# ---------------------------------------------------------------------------
# kernel 2: flash-style causal attention + fused output projection
# grid (B, q-tiles); heads unrolled in-kernel; kv tiles via lax.fori_loop with
# a causal trip count; K/V resident across the q-tile loop.
# ---------------------------------------------------------------------------
def _attn_proj_kernel(q_ref, k_ref, v_ref, wp_ref, bp_ref, o_ref, *, n_head):
    qi = pl.program_id(1)
    tq = q_ref.shape[2]
    hd = q_ref.shape[3]

    # Static lower-triangular mask.  kv tile size == tq and tiles are aligned,
    # so only the diagonal tile straddles the causal boundary; fully-past
    # tiles need no masking at all.
    row = lax.broadcasted_iota(jnp.int32, (tq, tq), 0)
    col = lax.broadcasted_iota(jnp.int32, (tq, tq), 1)
    diag_mask = col <= row

    head_outs = []
    for h in range(n_head):
        q_h = q_ref[0, h]                           # (tq, hd) bf16, pre-scaled

        def kv_step(k_t, v_t, carry, mask=None):
            m_prev, l_prev, acc_prev = carry
            s = lax.dot_general(q_h, k_t, (((1,), (1,)), ((), ())),
                                preferred_element_type=jnp.float32)  # (tq, tq)
            if mask is not None:
                s = jnp.where(mask, s, _NEG_INF)
            m_new = jnp.maximum(m_prev, jnp.max(s, axis=-1, keepdims=True))
            alpha = jnp.exp(m_prev - m_new)
            p = jnp.exp(s - m_new)                                   # f32
            l_new = alpha * l_prev + jnp.sum(p, axis=-1, keepdims=True)
            acc_new = alpha * acc_prev + jnp.dot(
                p.astype(v_t.dtype), v_t, preferred_element_type=jnp.float32)
            return m_new, l_new, acc_new

        def past_body(ki, carry):
            start = pl.multiple_of(ki * tq, tq)
            k_t = k_ref[0, h, pl.ds(start, tq), :]
            v_t = v_ref[0, h, pl.ds(start, tq), :]
            return kv_step(k_t, v_t, carry)          # fully past: no mask

        init = (jnp.full((tq, 1), _NEG_INF, jnp.float32),
                jnp.zeros((tq, 1), jnp.float32),
                jnp.zeros((tq, hd), jnp.float32))
        # Trip count derived from the q-tile index: causally-future kv tiles
        # are never touched (no DMA, no grid step, no compute).
        carry = lax.fori_loop(0, qi, past_body, init)

        # Diagonal tile (always exists): apply the causal mask.
        start = pl.multiple_of(qi * tq, tq)
        k_t = k_ref[0, h, pl.ds(start, tq), :]
        v_t = v_ref[0, h, pl.ds(start, tq), :]
        m_f, l_f, acc_f = kv_step(k_t, v_t, carry, mask=diag_mask)

        # TODO(synk): attn_dropout is identity (dropout=0.0 / eval mode).
        head_out = acc_f * pl.reciprocal(l_f, approx=True)          # (tq, hd)
        head_outs.append(head_out.astype(wp_ref.dtype))

    # Head concat -> one full-depth (tq, C) x (C, C) projection matmul
    # (better MXU contraction depth than per-head K=hd matmuls).
    y = jnp.concatenate(head_outs, axis=-1)                          # (tq, C)
    out = jnp.dot(y, wp_ref[...], preferred_element_type=jnp.float32) + bp_ref[...]
    # TODO(synk): proj_drop is identity (dropout=0.0 / eval mode).
    o_ref[0] = out.astype(o_ref.dtype)


# ---------------------------------------------------------------------------
# wrapper
# ---------------------------------------------------------------------------
def _pick_tile(n, preferred):
    for t in preferred:
        if t <= n and n % t == 0:
            return t
    return n


def causal_self_attention(x, w_qkv, b_qkv, w_proj, b_proj, *, n_head,
                          tx=None, tq=None):
    B, T, C = x.shape
    assert C % n_head == 0
    hd = C // n_head
    scale = 1.0 / math.sqrt(hd)

    # Kernel 1 is HBM-bound: use the largest x tile that divides T (prefer 512).
    tx = tx if tx is not None else _pick_tile(T, (512, 1024, 256, 128, 64, 32, 16, 8))
    # Kernel 2: tq bounds the (tq, tq) f32 score tile / vreg pressure.
    tq = tq if tq is not None else _pick_tile(T, (128, 256, 64, 32, 16, 8))
    assert T % tx == 0 and T % tq == 0

    cdt = jnp.bfloat16
    x_c = x.astype(cdt)
    w_a = w_qkv.astype(cdt)
    b_a = b_qkv.astype(jnp.float32).reshape(1, 3 * C)
    w_p = w_proj.astype(cdt)
    b_p = b_proj.astype(jnp.float32).reshape(1, C)

    vmem = _vmem_limit_bytes()

    # --- kernel 1: fused QKV projection -> q/k/v in [B, H, T, hd] ----------
    q, k, v = pl.pallas_call(
        functools.partial(_qkv_kernel, n_head=n_head, scale=scale),
        out_shape=(jax.ShapeDtypeStruct((B, n_head, T, hd), cdt),) * 3,
        grid=(B, T // tx),
        in_specs=[
            pl.BlockSpec((1, tx, C), lambda b, i: (b, i, 0)),        # x tile
            pl.BlockSpec((C, 3 * C), lambda b, i: (0, 0)),           # W_qkv (resident)
            pl.BlockSpec((1, 3 * C), lambda b, i: (0, 0)),           # b_qkv
        ],
        out_specs=[pl.BlockSpec((1, n_head, tx, hd),
                                lambda b, i: (b, 0, i, 0))] * 3,
        compiler_params=pltpu.CompilerParams(
            dimension_semantics=("parallel", "parallel"),
            vmem_limit_bytes=vmem),
    )(x_c, w_a, b_a)

    # --- kernel 2: flash attention + output projection ----------------------
    # K/V block index depends only on b, so with qi as the inner grid axis the
    # full per-batch K/V stays resident in VMEM across all q tiles (one HBM
    # pass total).  W_proj / b_proj are resident across the whole grid.
    out = pl.pallas_call(
        functools.partial(_attn_proj_kernel, n_head=n_head),
        out_shape=jax.ShapeDtypeStruct((B, T, C), x.dtype),
        grid=(B, T // tq),
        in_specs=[
            pl.BlockSpec((1, n_head, tq, hd), lambda b, qi: (b, 0, qi, 0)),  # q
            pl.BlockSpec((1, n_head, T, hd), lambda b, qi: (b, 0, 0, 0)),    # k
            pl.BlockSpec((1, n_head, T, hd), lambda b, qi: (b, 0, 0, 0)),    # v
            pl.BlockSpec((C, C), lambda b, qi: (0, 0)),                      # W_proj
            pl.BlockSpec((1, C), lambda b, qi: (0, 0)),                      # b_proj
        ],
        out_specs=pl.BlockSpec((1, tq, C), lambda b, qi: (b, qi, 0)),
        compiler_params=pltpu.CompilerParams(
            dimension_semantics=("parallel", "parallel"),
            vmem_limit_bytes=vmem),
    )(q, k, v, w_p, b_p)
    return out


# ---------------------------------------------------------------------------
# pure-JAX reference (mirrors the PyTorch forward, all f32)
# ---------------------------------------------------------------------------
def _reference(x, w_qkv, b_qkv, w_proj, b_proj, n_head):
    B, T, C = x.shape
    hd = C // n_head
    qkv = x @ w_qkv + b_qkv.reshape(-1)
    q, k, v = jnp.split(qkv, 3, axis=-1)
    q = q.reshape(B, T, n_head, hd).transpose(0, 2, 1, 3)
    k = k.reshape(B, T, n_head, hd).transpose(0, 2, 1, 3)
    v = v.reshape(B, T, n_head, hd).transpose(0, 2, 1, 3)
    att = jnp.einsum('bhqd,bhkd->bhqk', q, k) / math.sqrt(hd)
    mask = jnp.tril(jnp.ones((T, T), dtype=bool))
    att = jnp.where(mask[None, None], att, -jnp.inf)
    att = jax.nn.softmax(att, axis=-1)
    y = jnp.einsum('bhqk,bhkd->bhqd', att, v)
    y = y.transpose(0, 2, 1, 3).reshape(B, T, C)
    return y @ w_proj + b_proj.reshape(-1)


if __name__ == "__main__":
    # Small config consistent with the module: n_embd=32, n_head=4, T=32.
    # tx=16 exercises multiple kernel-1 tiles; tq=8 gives 4 q tiles so the
    # in-kernel causal kv loop runs 0..3 iterations plus the masked diagonal.
    B, T, C, n_head = 2, 32, 32, 4

    key = jax.random.PRNGKey(0)
    kx, k1, k2, k3, k4 = jax.random.split(key, 5)

    x = jax.random.normal(kx, (B, T, C), dtype=jnp.float32)
    w_qkv = 0.02 * jax.random.normal(k1, (C, 3 * C), dtype=jnp.float32)
    b_qkv = 0.02 * jax.random.normal(k2, (1, 3 * C), dtype=jnp.float32)
    w_proj = 0.02 * jax.random.normal(k3, (C, C), dtype=jnp.float32)
    b_proj = 0.02 * jax.random.normal(k4, (1, C), dtype=jnp.float32)

    out = causal_self_attention(x, w_qkv, b_qkv, w_proj, b_proj,
                                n_head=n_head, tx=16, tq=8)
    out = jax.block_until_ready(out)

    ref = _reference(x, w_qkv, b_qkv, w_proj, b_proj, n_head)
    # bf16 MXU operands with f32 accumulation -> bf16-level tolerance.
    np.testing.assert_allclose(np.asarray(out, dtype=np.float32),
                               np.asarray(ref), rtol=5e-2, atol=5e-3)

    print("KERNEL_OK")
</pallas_src>

<mosaic_0001>
module attributes {stable_mosaic.version = 11 : i64} {
  func.func @_qkv_kernel(%arg0: i32, %arg1: i32, %arg2: memref<1x16x32xbf16, #tpu.memory_space<vmem>>, %arg3: memref<32x96xbf16, #tpu.memory_space<vmem>>, %arg4: memref<1x96xf32, #tpu.memory_space<vmem>>, %arg5: memref<1x4x16x8xbf16, #tpu.memory_space<vmem>>, %arg6: memref<1x4x16x8xbf16, #tpu.memory_space<vmem>>, %arg7: memref<1x4x16x8xbf16, #tpu.memory_space<vmem>>) attributes {dimension_semantics = [#tpu.dimension_semantics<parallel>, #tpu.dimension_semantics<parallel>], iteration_bounds = array<i64: 2, 2>, scalar_prefetch = 0 : i64, scratch_operands = 0 : i64, tpu.core_type = #tpu.core_type<tc>, window_params = [{transform_indices = @transform_0, window_bounds = array<i64: 1, 16, 32>}, {pipeline_mode = #tpu.pipeline_mode<synchronous>, transform_indices = @transform_1, window_bounds = array<i64: 32, 96>}, {pipeline_mode = #tpu.pipeline_mode<synchronous>, transform_indices = @transform_2, window_bounds = array<i64: 1, 96>}, {transform_indices = @transform_3, window_bounds = array<i64: 1, 4, 16, 8>}, {transform_indices = @transform_4, window_bounds = array<i64: 1, 4, 16, 8>}, {transform_indices = @transform_5, window_bounds = array<i64: 1, 4, 16, 8>}]} {
    %c0 = arith.constant 0 : index
    %c0_0 = arith.constant 0 : index
    %c0_1 = arith.constant 0 : index
    %0 = vector.load %arg2[%c0, %c0_0, %c0_1] : memref<1x16x32xbf16, #tpu.memory_space<vmem>>, vector<1x16x32xbf16>
    %1 = vector.shape_cast %0 : vector<1x16x32xbf16> to vector<16x32xbf16>
    %c0_2 = arith.constant 0 : index
    %c0_3 = arith.constant 0 : index
    %2 = vector.load %arg3[%c0_2, %c0_3] : memref<32x96xbf16, #tpu.memory_space<vmem>>, vector<32x96xbf16>
    %cst = arith.constant dense<0.000000e+00> : vector<16x96xf32>
    %3 = tpu.matmul %1, %2, %cst {dimension_numbers = #tpu.dot_dimension_numbers<[1], [0], [0], [1], [0, 0, 1, 1], [], []>} : vector<16x32xbf16>, vector<32x96xbf16>, vector<16x96xf32> -> vector<16x96xf32>
    %c0_4 = arith.constant 0 : index
    %c0_5 = arith.constant 0 : index
    %4 = vector.load %arg4[%c0_4, %c0_5] : memref<1x96xf32, #tpu.memory_space<vmem>>, vector<1x96xf32>
    %5 = vector.broadcast %4 : vector<1x96xf32> to vector<16x96xf32>
    %6 = arith.addf %3, %5 : vector<16x96xf32>
    %7 = vector.extract_strided_slice %6 {offsets = [0, 0], sizes = [16, 8], strides = [1, 1]} : vector<16x96xf32> to vector<16x8xf32>
    %cst_6 = arith.constant 0.353553385 : f32
    %8 = vector.broadcast %cst_6 : f32 to vector<16x8xf32>
    %9 = arith.mulf %7, %8 : vector<16x8xf32>
    %10 = arith.truncf %9 : vector<16x8xf32> to vector<16x8xbf16>
    %c0_7 = arith.constant 0 : index
    %c0_8 = arith.constant 0 : index
    %c0_9 = arith.constant 0 : index
    %c0_10 = arith.constant 0 : index
    %11 = vector.load %arg5[%c0_7, %c0_8, %c0_9, %c0_10] : memref<1x4x16x8xbf16, #tpu.memory_space<vmem>>, vector<1x1x16x8xbf16>
    %12 = vector.shape_cast %11 : vector<1x1x16x8xbf16> to vector<16x8xbf16>
    %13 = vector.shape_cast %10 : vector<16x8xbf16> to vector<1x1x16x8xbf16>
    tpu.vector_store %arg5[%c0_7, %c0_8, %c0_9, %c0_10], %13 {strides = array<i32>} : memref<1x4x16x8xbf16, #tpu.memory_space<vmem>>, vector<1x1x16x8xbf16>,
    %14 = vector.extract_strided_slice %6 {offsets = [0, 32], sizes = [16, 8], strides = [1, 1]} : vector<16x96xf32> to vector<16x8xf32>
    %15 = arith.truncf %14 : vector<16x8xf32> to vector<16x8xbf16>
    %c0_11 = arith.constant 0 : index
    %c0_12 = arith.constant 0 : index
    %c0_13 = arith.constant 0 : index
    %c0_14 = arith.constant 0 : index
    %16 = vector.load %arg6[%c0_11, %c0_12, %c0_13, %c0_14] : memref<1x4x16x8xbf16, #tpu.memory_space<vmem>>, vector<1x1x16x8xbf16>
    %17 = vector.shape_cast %16 : vector<1x1x16x8xbf16> to vector<16x8xbf16>
    %18 = vector.shape_cast %15 : vector<16x8xbf16> to vector<1x1x16x8xbf16>
    tpu.vector_store %arg6[%c0_11, %c0_12, %c0_13, %c0_14], %18 {strides = array<i32>} : memref<1x4x16x8xbf16, #tpu.memory_space<vmem>>, vector<1x1x16x8xbf16>,
    %19 = vector.extract_strided_slice %6 {offsets = [0, 64], sizes = [16, 8], strides = [1, 1]} : vector<16x96xf32> to vector<16x8xf32>
    %20 = arith.truncf %19 : vector<16x8xf32> to vector<16x8xbf16>
    %c0_15 = arith.constant 0 : index
    %c0_16 = arith.constant 0 : index
    %c0_17 = arith.constant 0 : index
    %c0_18 = arith.constant 0 : index
    %21 = vector.load %arg7[%c0_15, %c0_16, %c0_17, %c0_18] : memref<1x4x16x8xbf16, #tpu.memory_space<vmem>>, vector<1x1x16x8xbf16>
    %22 = vector.shape_cast %21 : vector<1x1x16x8xbf16> to vector<16x8xbf16>
    %23 = vector.shape_cast %20 : vector<16x8xbf16> to vector<1x1x16x8xbf16>
    tpu.vector_store %arg7[%c0_15, %c0_16, %c0_17, %c0_18], %23 {strides = array<i32>} : memref<1x4x16x8xbf16, #tpu.memory_space<vmem>>, vector<1x1x16x8xbf16>,
    %24 = vector.extract_strided_slice %6 {offsets = [0, 8], sizes = [16, 8], strides = [1, 1]} : vector<16x96xf32> to vector<16x8xf32>
    %cst_19 = arith.constant 0.353553385 : f32
    %25 = vector.broadcast %cst_19 : f32 to vector<16x8xf32>
    %26 = arith.mulf %24, %25 : vector<16x8xf32>
    %27 = arith.truncf %26 : vector<16x8xf32> to vector<16x8xbf16>
    %c0_20 = arith.constant 0 : index
    %c1 = arith.constant 1 : index
    %c0_21 = arith.constant 0 : index
    %c0_22 = arith.constant 0 : index
    %28 = vector.load %arg5[%c0_20, %c1, %c0_21, %c0_22] : memref<1x4x16x8xbf16, #tpu.memory_space<vmem>>, vector<1x1x16x8xbf16>
    %29 = vector.shape_cast %28 : vector<1x1x16x8xbf16> to vector<16x8xbf16>
    %30 = vector.shape_cast %27 : vector<16x8xbf16> to vector<1x1x16x8xbf16>
    tpu.vector_store %arg5[%c0_20, %c1, %c0_21, %c0_22], %30 {strides = array<i32>} : memref<1x4x16x8xbf16, #tpu.memory_space<vmem>>, vector<1x1x16x8xbf16>,
    %31 = vector.extract_strided_slice %6 {offsets = [0, 40], sizes = [16, 8], strides = [1, 1]} : vector<16x96xf32> to vector<16x8xf32>
    %32 = arith.truncf %31 : vector<16x8xf32> to vector<16x8xbf16>
    %c0_23 = arith.constant 0 : index
    %c1_24 = arith.constant 1 : index
    %c0_25 = arith.constant 0 : index
    %c0_26 = arith.constant 0 : index
    %33 = vector.load %arg6[%c0_23, %c1_24, %c0_25, %c0_26] : memref<1x4x16x8xbf16, #tpu.memory_space<vmem>>, vector<1x1x16x8xbf16>
    %34 = vector.shape_cast %33 : vector<1x1x16x8xbf16> to vector<16x8xbf16>
    %35 = vector.shape_cast %32 : vector<16x8xbf16> to vector<1x1x16x8xbf16>
    tpu.vector_store %arg6[%c0_23, %c1_24, %c0_25, %c0_26], %35 {strides = array<i32>} : memref<1x4x16x8xbf16, #tpu.memory_space<vmem>>, vector<1x1x16x8xbf16>,
    %36 = vector.extract_strided_slice %6 {offsets = [0, 72], sizes = [16, 8], strides = [1, 1]} : vector<16x96xf32> to vector<16x8xf32>
    %37 = arith.truncf %36 : vector<16x8xf32> to vector<16x8xbf16>
    %c0_27 = arith.constant 0 : index
    %c1_28 = arith.constant 1 : index
    %c0_29 = arith.constant 0 : index
    %c0_30 = arith.constant 0 : index
    %38 = vector.load %arg7[%c0_27, %c1_28, %c0_29, %c0_30] : memref<1x4x16x8xbf16, #tpu.memory_space<vmem>>, vector<1x1x16x8xbf16>
    %39 = vector.shape_cast %38 : vector<1x1x16x8xbf16> to vector<16x8xbf16>
    %40 = vector.shape_cast %37 : vector<16x8xbf16> to vector<1x1x16x8xbf16>
    tpu.vector_store %arg7[%c0_27, %c1_28, %c0_29, %c0_30], %40 {strides = array<i32>} : memref<1x4x16x8xbf16, #tpu.memory_space<vmem>>, vector<1x1x16x8xbf16>,
    %41 = vector.extract_strided_slice %6 {offsets = [0, 16], sizes = [16, 8], strides = [1, 1]} : vector<16x96xf32> to vector<16x8xf32>
    %cst_31 = arith.constant 0.353553385 : f32
    %42 = vector.broadcast %cst_31 : f32 to vector<16x8xf32>
    %43 = arith.mulf %41, %42 : vector<16x8xf32>
    %44 = arith.truncf %43 : vector<16x8xf32> to vector<16x8xbf16>
    %c0_32 = arith.constant 0 : index
    %c2 = arith.constant 2 : index
    %c0_33 = arith.constant 0 : index
    %c0_34 = arith.constant 0 : index
    %45 = vector.load %arg5[%c0_32, %c2, %c0_33, %c0_34] : memref<1x4x16x8xbf16, #tpu.memory_space<vmem>>, vector<1x1x16x8xbf16>
    %46 = vector.shape_cast %45 : vector<1x1x16x8xbf16> to vector<16x8xbf16>
    %47 = vector.shape_cast %44 : vector<16x8xbf16> to vector<1x1x16x8xbf16>
    tpu.vector_store %arg5[%c0_32, %c2, %c0_33, %c0_34], %47 {strides = array<i32>} : memref<1x4x16x8xbf16, #tpu.memory_space<vmem>>, vector<1x1x16x8xbf16>,
    %48 = vector.extract_strided_slice %6 {offsets = [0, 48], sizes = [16, 8], strides = [1, 1]} : vector<16x96xf32> to vector<16x8xf32>
    %49 = arith.truncf %48 : vector<16x8xf32> to vector<16x8xbf16>
    %c0_35 = arith.constant 0 : index
    %c2_36 = arith.constant 2 : index
    %c0_37 = arith.constant 0 : index
    %c0_38 = arith.constant 0 : index
    %50 = vector.load %arg6[%c0_35, %c2_36, %c0_37, %c0_38] : memref<1x4x16x8xbf16, #tpu.memory_space<vmem>>, vector<1x1x16x8xbf16>
    %51 = vector.shape_cast %50 : vector<1x1x16x8xbf16> to vector<16x8xbf16>
    %52 = vector.shape_cast %49 : vector<16x8xbf16> to vector<1x1x16x8xbf16>
    tpu.vector_store %arg6[%c0_35, %c2_36, %c0_37, %c0_38], %52 {strides = array<i32>} : memref<1x4x16x8xbf16, #tpu.memory_space<vmem>>, vector<1x1x16x8xbf16>,
    %53 = vector.extract_strided_slice %6 {offsets = [0, 80], sizes = [16, 8], strides = [1, 1]} : vector<16x96xf32> to vector<16x8xf32>
    %54 = arith.truncf %53 : vector<16x8xf32> to vector<16x8xbf16>
    %c0_39 = arith.constant 0 : index
    %c2_40 = arith.constant 2 : index
    %c0_41 = arith.constant 0 : index
    %c0_42 = arith.constant 0 : index
    %55 = vector.load %arg7[%c0_39, %c2_40, %c0_41, %c0_42] : memref<1x4x16x8xbf16, #tpu.memory_space<vmem>>, vector<1x1x16x8xbf16>
    %56 = vector.shape_cast %55 : vector<1x1x16x8xbf16> to vector<16x8xbf16>
    %57 = vector.shape_cast %54 : vector<16x8xbf16> to vector<1x1x16x8xbf16>
    tpu.vector_store %arg7[%c0_39, %c2_40, %c0_41, %c0_42], %57 {strides = array<i32>} : memref<1x4x16x8xbf16, #tpu.memory_space<vmem>>, vector<1x1x16x8xbf16>,
    %58 = vector.extract_strided_slice %6 {offsets = [0, 24], sizes = [16, 8], strides = [1, 1]} : vector<16x96xf32> to vector<16x8xf32>
    %cst_43 = arith.constant 0.353553385 : f32
    %59 = vector.broadcast %cst_43 : f32 to vector<16x8xf32>
    %60 = arith.mulf %58, %59 : vector<16x8xf32>
    %61 = arith.truncf %60 : vector<16x8xf32> to vector<16x8xbf16>
    %c0_44 = arith.constant 0 : index
    %c3 = arith.constant 3 : index
    %c0_45 = arith.constant 0 : index
    %c0_46 = arith.constant 0 : index
    %62 = vector.load %arg5[%c0_44, %c3, %c0_45, %c0_46] : memref<1x4x16x8xbf16, #tpu.memory_space<vmem>>, vector<1x1x16x8xbf16>
    %63 = vector.shape_cast %62 : vector<1x1x16x8xbf16> to vector<16x8xbf16>
    %64 = vector.shape_cast %61 : vector<16x8xbf16> to vector<1x1x16x8xbf16>
    tpu.vector_store %arg5[%c0_44, %c3, %c0_45, %c0_46], %64 {strides = array<i32>} : memref<1x4x16x8xbf16, #tpu.memory_space<vmem>>, vector<1x1x16x8xbf16>,
    %65 = vector.extract_strided_slice %6 {offsets = [0, 56], sizes = [16, 8], strides = [1, 1]} : vector<16x96xf32> to vector<16x8xf32>
    %66 = arith.truncf %65 : vector<16x8xf32> to vector<16x8xbf16>
    %c0_47 = arith.constant 0 : index
    %c3_48 = arith.constant 3 : index
    %c0_49 = arith.constant 0 : index
    %c0_50 = arith.constant 0 : index
    %67 = vector.load %arg6[%c0_47, %c3_48, %c0_49, %c0_50] : memref<1x4x16x8xbf16, #tpu.memory_space<vmem>>, vector<1x1x16x8xbf16>
    %68 = vector.shape_cast %67 : vector<1x1x16x8xbf16> to vector<16x8xbf16>
    %69 = vector.shape_cast %66 : vector<16x8xbf16> to vector<1x1x16x8xbf16>
    tpu.vector_store %arg6[%c0_47, %c3_48, %c0_49, %c0_50], %69 {strides = array<i32>} : memref<1x4x16x8xbf16, #tpu.memory_space<vmem>>, vector<1x1x16x8xbf16>,
    %70 = vector.extract_strided_slice %6 {offsets = [0, 88], sizes = [16, 8], strides = [1, 1]} : vector<16x96xf32> to vector<16x8xf32>
    %71 = arith.truncf %70 : vector<16x8xf32> to vector<16x8xbf16>
    %c0_51 = arith.constant 0 : index
    %c3_52 = arith.constant 3 : index
    %c0_53 = arith.constant 0 : index
    %c0_54 = arith.constant 0 : index
    %72 = vector.load %arg7[%c0_51, %c3_52, %c0_53, %c0_54] : memref<1x4x16x8xbf16, #tpu.memory_space<vmem>>, vector<1x1x16x8xbf16>
    %73 = vector.shape_cast %72 : vector<1x1x16x8xbf16> to vector<16x8xbf16>
    %74 = vector.shape_cast %71 : vector<16x8xbf16> to vector<1x1x16x8xbf16>
    tpu.vector_store %arg7[%c0_51, %c3_52, %c0_53, %c0_54], %74 {strides = array<i32>} : memref<1x4x16x8xbf16, #tpu.memory_space<vmem>>, vector<1x1x16x8xbf16>,
    return
  }
  func.func @transform_0(%arg0: i32, %arg1: i32) -> (i32, i32, i32) {
    %c0_i32 = arith.constant 0 : i32
    %c0_i32_0 = arith.constant 0 : i32
    return %arg0, %arg1, %c0_i32 : i32, i32, i32
  }
  func.func @transform_1(%arg0: i32, %arg1: i32) -> (i32, i32) {
    %c0_i32 = arith.constant 0 : i32
    %c0_i32_0 = arith.constant 0 : i32
    %c0_i32_1 = arith.constant 0 : i32
    return %c0_i32, %c0_i32_0 : i32, i32
  }
  func.func @transform_2(%arg0: i32, %arg1: i32) -> (i32, i32) {
    %c0_i32 = arith.constant 0 : i32
    %c0_i32_0 = arith.constant 0 : i32
    %c0_i32_1 = arith.constant 0 : i32
    return %c0_i32, %c0_i32_0 : i32, i32
  }
  func.func @transform_3(%arg0: i32, %arg1: i32) -> (i32, i32, i32, i32) {
    %c0_i32 = arith.constant 0 : i32
    %c0_i32_0 = arith.constant 0 : i32
    %c0_i32_1 = arith.constant 0 : i32
    return %arg0, %c0_i32, %arg1, %c0_i32_0 : i32, i32, i32, i32
  }
  func.func @transform_4(%arg0: i32, %arg1: i32) -> (i32, i32, i32, i32) {
    %c0_i32 = arith.constant 0 : i32
    %c0_i32_0 = arith.constant 0 : i32
    %c0_i32_1 = arith.constant 0 : i32
    return %arg0, %c0_i32, %arg1, %c0_i32_0 : i32, i32, i32, i32
  }
  func.func @transform_5(%arg0: i32, %arg1: i32) -> (i32, i32, i32, i32) {
    %c0_i32 = arith.constant 0 : i32
    %c0_i32_0 = arith.constant 0 : i32
    %c0_i32_1 = arith.constant 0 : i32
    return %arg0, %c0_i32, %arg1, %c0_i32_0 : i32, i32, i32, i32
  }
}

</mosaic_0001>

<llo_original>
// kernel: tpu_custom_call.1
$region0: #{tpu_custom_call.1}
  #allocation0 [shape = 'u32[]', space=smem, size = 0x4, offset = 0x4, fixed_abs, tag = 'smem constant byte address 0x4 - core index']
  #allocation1 [shape = 'u32[72,128]{1,0:T(1,128)}', space=vmem, size = 0x9000, scoped, tag = 'internal scratch']
  %s0 = inlined_call_operand.hbm [shape: bf16[2,32,32], index: 0, kind: input, shape index: {}]
  %s1 = inlined_call_operand.hbm [shape: bf16[32,96], index: 1, kind: input, shape index: {}]
  %s2 = inlined_call_operand.vmem [shape: f32[1,96], index: 2, kind: input, shape index: {}]
  %s3 = inlined_call_operand.vmem [shape: bf16[2,4,32,8], index: 3, kind: output, shape index: {0}]
  %s4 = inlined_call_operand.vmem [shape: bf16[2,4,32,8], index: 4, kind: output, shape index: {1}]
  %s5 = inlined_call_operand.vmem [shape: bf16[2,4,32,8], index: 5, kind: output, shape index: {2}]
  %6 = xla_tuple %s3, %s4, %s5
  %s7 = sld [smem:[#allocation0]]
  $region180: #{tpu_custom_call.1} parent=0
    _
  %s9 = ssub.s32 1, %s7
  %s10 = scalar_select 0, %s9, %s7
  $region1: #{tpu_custom_call.1} parent=0
    #allocation2 [shape = 'u8[8192]{0}', space=vmem, size = 0x2000, scoped, tag = 'input window, operand 0']
    #allocation3 [shape = 's32[2]{0}', space=sflag, size = 0x8, scoped, tag = 'scoped memory for tpu_custom_call.1']
    #allocation4 [shape = 'u8[8192]{0}', space=vmem, size = 0x2000, scoped, tag = 'input window, operand 1, single buffered']
    #allocation5 [shape = 's32[1]{0}', space=sflag, size = 0x4, scoped, tag = 'scoped memory for tpu_custom_call.1']
    #allocation6 [shape = 'u8[32768]{0}', space=vmem, size = 0x8000, scoped, tag = 'output window, operand 0']
    #allocation7 [shape = 'u8[32768]{0}', space=vmem, size = 0x8000, scoped, tag = 'output window, operand 1']
    #allocation8 [shape = 'u8[32768]{0}', space=vmem, size = 0x8000, scoped, tag = 'output window, operand 2']
    %11 = vsyncpa [#allocation3], 0
    %s12 = scalar_lea.sflag [#allocation3], 1
    %13 = vsyncpa %s12, 0
    %14 = vsyncpa [#allocation5], 0
    loop: start=0, step=1, limit=6
    $region2: #{tpu_custom_call.1} parent=1 // loop_pre_header
      _
    $region3: #{tpu_custom_call.1} parent=1 // loop_header
      %s16 = sphi 0, %s20
      %p17 = scmp.ge.s32.totalorder %s16, 6
      %s23 = sphi 0, %s35
      %s24 = sphi 0, %s31
      %s25 = sphi 0, %s23
      %s26 = sphi 0, %s24
      %s27 = sphi 0, %s25
      %s28 = sphi 0, %s26
      %s40 = sphi 0, %s42
      %s43 = sphi 0, %s40
      %s44 = sphi 0, %s43
      %s60 = sphi 0, %s44
      %s64 = sphi 0, %s64
      %s66 = sphi 0, %s64
      %s67 = sphi 0, %s66
      %s81 = sphi 0, %s67
      %s85 = sphi 0, %s85
      %s87 = sphi 0, %s85
      %s88 = sphi 0, %s87
      %s102 = sphi 0, %s88
      %s110 = sphi 0, %s112
      %s113 = sphi 0, %s110
      %s114 = sphi 0, %s113
      %s130 = sphi 0, %s114
      %s138 = sphi 0, %s140
      %s141 = sphi 0, %s138
      %s142 = sphi 0, %s141
      %s158 = sphi 0, %s142
      %s166 = sphi 0, %s168
      %s169 = sphi 0, %s166
      %s170 = sphi 0, %s169
      %s186 = sphi 0, %s170
    $region4: #{tpu_custom_call.1} parent=1 // loop_header_branch
      %19 = sbr.rel (%p17) target = $region8
    $region5: #{tpu_custom_call.1} parent=1 // loop_body
      %s21 = ssub.s32 %s16, 1
      %s22 = ssub.s32 %s16, 2
      %s29 = sadd.s32 1, %s24
      %p30 = scmp.ge.s32.totalorder %s29, 2
      %s31 = scalar_select %p30, 0, %s29
      %s32 = sadd.s32 1, %s23
      %s33 = scalar_select %p30, %s32, %s23
      %p34 = scmp.ge.s32.totalorder %s33, 2
      %s35 = scalar_select %p34, 0, %s33
      %s36 = ssub.s32 %s23, %s35
      %s37 = ssub.s32 %s24, %s31
      %s38 = sor.u32 %s36, %s37
      %p39 = scmp.eq.s32.totalorder %s38, 0
      %s41 = sadd.s32 %s40, 1
      %s42 = scalar_select %p39, %s40, %s41
      %p45 = pneg %p39
      %p46 = scmp.eq.s32.totalorder %s16, 3
      %p47 = por %p45, %p46
      %p48 = scmp.ne.s32.totalorder %s40, %s43
      %p49 = scmp.eq.s32.totalorder %s16, 0
      %p50 = por %p48, %p49
      %p51 = scmp.ne.s32.totalorder %s40, %s43
      %p52 = scmp.eq.s32.totalorder %s21, 3
      %p53 = por %p51, %p52
      %p54 = scmp.ne.s32.totalorder %s43, %s44
      %p55 = scmp.eq.s32.totalorder %s21, 0
      %p56 = por %p54, %p55
      %p57 = scmp.ne.s32.totalorder %s43, %s44
      %p58 = scmp.eq.s32.totalorder %s22, 3
      %p59 = por %p57, %p58
      %p61 = scmp.ne.s32.totalorder %s44, %s60
      %p62 = scmp.eq.s32.totalorder %s22, 0
      %p63 = por %p61, %p62
      %s65 = sadd.s32 %s64, 1
      %p68 = scmp.eq.s32.totalorder %s16, 3
      %p69 = scmp.ne.s32.totalorder %s64, %s66
      %p70 = scmp.eq.s32.totalorder %s16, 0
      %p71 = por %p69, %p70
      %p72 = scmp.ne.s32.totalorder %s64, %s66
      %p73 = scmp.eq.s32.totalorder %s21, 3
      %p74 = por %p72, %p73
      %p75 = scmp.ne.s32.totalorder %s66, %s67
      %p76 = scmp.eq.s32.totalorder %s21, 0
      %p77 = por %p75, %p76
      %p78 = scmp.ne.s32.totalorder %s66, %s67
      %p79 = scmp.eq.s32.totalorder %s22, 3
      %p80 = por %p78, %p79
      %p82 = scmp.ne.s32.totalorder %s67, %s81
      %p83 = scmp.eq.s32.totalorder %s22, 0
      %p84 = por %p82, %p83
      %s86 = sadd.s32 %s85, 1
      %p89 = scmp.eq.s32.totalorder %s16, 3
      %p90 = scmp.ne.s32.totalorder %s85, %s87
      %p91 = scmp.eq.s32.totalorder %s16, 0
      %p92 = por %p90, %p91
      %p93 = scmp.ne.s32.totalorder %s85, %s87
      %p94 = scmp.eq.s32.totalorder %s21, 3
      %p95 = por %p93, %p94
      %p96 = scmp.ne.s32.totalorder %s87, %s88
      %p97 = scmp.eq.s32.totalorder %s21, 0
      %p98 = por %p96, %p97
      %p99 = scmp.ne.s32.totalorder %s87, %s88
      %p100 = scmp.eq.s32.totalorder %s22, 3
      %p101 = por %p99, %p100
      %p103 = scmp.ne.s32.totalorder %s88, %s102
      %p104 = scmp.eq.s32.totalorder %s22, 0
      %p105 = por %p103, %p104
      %s106 = ssub.s32 %s23, %s35
      %s107 = ssub.s32 %s24, %s31
      %s108 = sor.u32 %s106, %s107
      %p109 = scmp.eq.s32.totalorder %s108, 0
      %s111 = sadd.s32 %s110, 1
      %s112 = scalar_select %p109, %s110, %s111
      %p115 = pneg %p109
      %p116 = scmp.eq.s32.totalorder %s16, 3
      %p117 = por %p115, %p116
      %p118 = scmp.ne.s32.totalorder %s110, %s113
      %p119 = scmp.eq.s32.totalorder %s16, 0
      %p120 = por %p118, %p119
      %p121 = scmp.ne.s32.totalorder %s110, %s113
      %p122 = scmp.eq.s32.totalorder %s21, 3
      %p123 = por %p121, %p122
      %p124 = scmp.ne.s32.totalorder %s113, %s114
      %p125 = scmp.eq.s32.totalorder %s21, 0
      %p126 = por %p124, %p125
      %p127 = scmp.ne.s32.totalorder %s113, %s114
      %p128 = scmp.eq.s32.totalorder %s22, 3
      %p129 = por %p127, %p128
      %p131 = scmp.ne.s32.totalorder %s114, %s130
      %p132 = scmp.eq.s32.totalorder %s22, 0
      %p133 = por %p131, %p132
      %s134 = ssub.s32 %s23, %s35
      %s135 = ssub.s32 %s24, %s31
      %s136 = sor.u32 %s134, %s135
      %p137 = scmp.eq.s32.totalorder %s136, 0
      %s139 = sadd.s32 %s138, 1
      %s140 = scalar_select %p137, %s138, %s139
      %p143 = pneg %p137
      %p144 = scmp.eq.s32.totalorder %s16, 3
      %p145 = por %p143, %p144
      %p146 = scmp.ne.s32.totalorder %s138, %s141
      %p147 = scmp.eq.s32.totalorder %s16, 0
      %p148 = por %p146, %p147
      %p149 = scmp.ne.s32.totalorder %s138, %s141
      %p150 = scmp.eq.s32.totalorder %s21, 3
      %p151 = por %p149, %p150
      %p152 = scmp.ne.s32.totalorder %s141, %s142
      %p153 = scmp.eq.s32.totalorder %s21, 0
      %p154 = por %p152, %p153
      %p155 = scmp.ne.s32.totalorder %s141, %s142
      %p156 = scmp.eq.s32.totalorder %s22, 3
      %p157 = por %p155, %p156
      %p159 = scmp.ne.s32.totalorder %s142, %s158
      %p160 = scmp.eq.s32.totalorder %s22, 0
      %p161 = por %p159, %p160
      %s162 = ssub.s32 %s23, %s35
      %s163 = ssub.s32 %s24, %s31
      %s164 = sor.u32 %s162, %s163
      %p165 = scmp.eq.s32.totalorder %s164, 0
      %s167 = sadd.s32 %s166, 1
      %s168 = scalar_select %p165, %s166, %s167
      %p171 = pneg %p165
      %p172 = scmp.eq.s32.totalorder %s16, 3
      %p173 = por %p171, %p172
      %p174 = scmp.ne.s32.totalorder %s166, %s169
      %p175 = scmp.eq.s32.totalorder %s16, 0
      %p176 = por %p174, %p175
      %p177 = scmp.ne.s32.totalorder %s166, %s169
      %p178 = scmp.eq.s32.totalorder %s21, 3
      %p179 = por %p177, %p178
      %p180 = scmp.ne.s32.totalorder %s169, %s170
      %p181 = scmp.eq.s32.totalorder %s21, 0
      %p182 = por %p180, %p181
      %p183 = scmp.ne.s32.totalorder %s169, %s170
      %p184 = scmp.eq.s32.totalorder %s22, 3
      %p185 = por %p183, %p184
      %p187 = scmp.ne.s32.totalorder %s170, %s186
      %p188 = scmp.eq.s32.totalorder %s22, 0
      %p189 = por %p187, %p188
      %p190 = scmp.le.s32.totalorder 1, %s16
      %p191 = scmp.lt.s32.totalorder %s16, 5
      %p192 = pnand %p190, %p191
      %p193 = pneg %p192
      // Predicated region
      $region9: #{tpu_custom_call.1} parent=5 // pred_check
        _
      $region10: #{tpu_custom_call.1} parent=5 // pred_check_branch
        %195 = sbr.rel (%p192) target = $region12
      $region11: #{tpu_custom_call.1} parent=5 // pred_region
        %s196 = ssub.s32 %s16, 1
        // Predicated region
        $region13: #{tpu_custom_call.1} parent=11 // pred_check
          %p197 = pneg %p77
        $region14: #{tpu_custom_call.1} parent=11 // pred_check_branch
          %199 = sbr.rel (%p197) target = $region16
        $region15: #{tpu_custom_call.1} parent=11 // pred_region
          %201 = vsyncadd [#allocation5], 0
          %s202 = sshll.u32 %s1, 4
          %s203 = int_to_ptr.hbm [resolvable:$true] %s202
          %s204 = sshll.u32 [#allocation4], 4
          %s205 = int_to_ptr.vmem [resolvable:$true] %s204
          %210 = dma.hbm_to_vmem [thread:$0]  %s203, 256, %s205, [#allocation5], 64, 64, 4
        $region16: #{tpu_custom_call.1} parent=11 // pred_fallthru
          _
        // Predicated region
        $region17: #{tpu_custom_call.1} parent=11 // pred_check
          %p211 = pneg %p98
        $region18: #{tpu_custom_call.1} parent=11 // pred_check_branch
          %213 = sbr.rel (%p211) target = $region20
        $region19: #{tpu_custom_call.1} parent=11 // pred_region
          _
        $region20: #{tpu_custom_call.1} parent=11 // pred_fallthru
          _
      $region12: #{tpu_custom_call.1} parent=5 // pred_fallthru
        _
      %p214 = scmp.lt.s32.totalorder %s16, 4
      // Predicated region
      $region21: #{tpu_custom_call.1} parent=5 // pred_check
        %p215 = pneg %p214
      $region22: #{tpu_custom_call.1} parent=5 // pred_check_branch
        %217 = sbr.rel (%p215) target = $region24
      $region23: #{tpu_custom_call.1} parent=5 // pred_region
        // Predicated region
        $region25: #{tpu_custom_call.1} parent=23 // pred_check
          %p218 = pneg %p50
        $region26: #{tpu_custom_call.1} parent=23 // pred_check_branch
          %220 = sbr.rel (%p218) target = $region28
        $region27: #{tpu_custom_call.1} parent=23 // pred_region
          %s221 = sand.u32 %s40, 1
          %s222 = scalar_lea.sflag [#allocation3], %s221
          %s223 = sand.u32 %s40, 1
          %s224 = smul.addr %s223, 8
          %s225 = scalar_lea.vmem [#allocation2], %s224
          %s226 = smul.u32 2, %s24
          %228 = vsyncadd %s222, 0
          %s229 = smul.addr %s23, 4
          %s230 = sadd.s32 %s226, %s229
          %s231 = smul.addr %s230, 4
          %s232 = scalar_lea.hbm %s0, %s231
          %s233 = sshll.u32 %s232, 4
          %s234 = int_to_ptr.hbm [resolvable:$true] %s233
          %s235 = sshll.u32 %s225, 4
          %s236 = int_to_ptr.vmem [resolvable:$true] %s235
          %241 = dma.hbm_to_vmem [thread:$0]  %s234, 128, %s236, %s222, 64, 64, 4
        $region28: #{tpu_custom_call.1} parent=23 // pred_fallthru
          _
      $region24: #{tpu_custom_call.1} parent=5 // pred_fallthru
        _
      %p242 = scmp.le.s32.totalorder 1, %s16
      %p243 = scmp.lt.s32.totalorder %s16, 5
      %p244 = pnand %p242, %p243
      %p245 = pneg %p244
      // Predicated region
      $region29: #{tpu_custom_call.1} parent=5 // pred_check
        _
      $region30: #{tpu_custom_call.1} parent=5 // pred_check_branch
        %247 = sbr.rel (%p244) target = $region32
      $region31: #{tpu_custom_call.1} parent=5 // pred_region
        %s248 = ssub.s32 %s16, 1
        %s249 = sand.u32 %s43, 1
        %s250 = scalar_lea.sflag [#allocation3], %s249
        %s251 = sand.u32 %s43, 1
        %s252 = smul.addr %s251, 8
        %s253 = scalar_lea.vmem [#allocation2], %s252
        // Predicated region
        $region33: #{tpu_custom_call.1} parent=31 // pred_check
          %p254 = pneg %p56
        $region34: #{tpu_custom_call.1} parent=31 // pred_check_branch
          %256 = sbr.rel (%p254) target = $region36
        $region35: #{tpu_custom_call.1} parent=31 // pred_region
          %258 = dma.done %s250, 128
        $region36: #{tpu_custom_call.1} parent=31 // pred_fallthru
          _
        // Predicated region
        $region37: #{tpu_custom_call.1} parent=31 // pred_check
          %p259 = pneg %p77
        $region38: #{tpu_custom_call.1} parent=31 // pred_check_branch
          %261 = sbr.rel (%p259) target = $region40
        $region39: #{tpu_custom_call.1} parent=31 // pred_region
          %263 = dma.done [#allocation5], 256
        $region40: #{tpu_custom_call.1} parent=31 // pred_fallthru
          _
        %s264 = sand.u32 %s43, 1
        %s265 = scalar_lea.sflag [#allocation3], %s264
        %s266 = sand.u32 %s43, 1
        %s267 = smul.addr %s266, 8
        %s268 = scalar_lea.vmem [#allocation2], %s267
        %p269 = pneg %p56
        %p270 = pneg %p53
        %p271 = pneg %p77
        %p272 = pneg %p74
        %p273 = pneg %p98
        %p274 = pneg %p95
        %p275 = pneg %p126
        %p276 = pneg %p123
        %s277 = sand.u32 %s113, 1
        %s278 = sand.u32 %s113, 1
        %s279 = smul.addr %s278, 32
        %s280 = scalar_lea.vmem [#allocation6], %s279
        %p281 = pneg %p154
        %p282 = pneg %p151
        %s283 = sand.u32 %s141, 1
        %s284 = sand.u32 %s141, 1
        %s285 = smul.addr %s284, 32
        %s286 = scalar_lea.vmem [#allocation7], %s285
        %p287 = pneg %p182
        %p288 = pneg %p179
        %s289 = sand.u32 %s169, 1
        %s290 = sand.u32 %s169, 1
        %s291 = smul.addr %s290, 32
        %s292 = scalar_lea.vmem [#allocation8], %s291
        %s293 = smul.u32 2, %s26
        %s294 = smul.u32 2, %s26
        %s295 = smul.u32 2, %s26
        %s296 = smul.u32 2, %s26
        %v298 = vld [vmem:[%s253] sm:$0xf]
        %v299 = vld [vmem:[%s253 + $0x4] sm:$0xf]
        %v300 = vld [vmem:[#allocation4] sm:$0xf]
        %v301 = vld [vmem:[#allocation4 + $0x4] sm:$0xf]
        %v302 = vld [vmem:[#allocation4 + $0x8] sm:$0xf]
        %v303 = vld [vmem:[#allocation4 + $0xc] sm:$0xf]
        %v304 = vld [vmem:[%s2] sm:$0x1]
        %v306 = vperm.slane %v304, 0
        %v310 = vunpack.c.l.b16 %v298
        %v311 = vunpack.c.l.b16 %v299
        %v312 = vpack.c.b16 %v311, %v310
        %v317 = vunpack.c.l.b16 %v300
        %v318 = vunpack.c.l.b16 %v301
        %v319 = vunpack.c.l.b16 %v302
        %v320 = vunpack.c.l.b16 %v303
        %v321 = vpack.c.b16 %v318, %v317
        %v322 = vpack.c.b16 %v320, %v319
        %vm325 = vcmask 261120
        %v327 = vsel %vm325, %v312, 0
        %329 = vmatpush.bf16.msra.mxu0 0
        %330 = vmatpush.bf16.msra.mxu0 0
        %331 = vmatpush.bf16.msra.mxu0 0
        %332 = vmatpush.bf16.msra.mxu0 0
        %333 = vmatpush.bf16.msra.mxu0 0
        %334 = vmatpush.bf16.msra.mxu0 0
        %335 = vmatpush.bf16.msra.mxu0 %v322
        %336 = vmatpush.bf16.msra.mxu0 %v321
        %337 = vmatmul.bf16.gmra.mxu0 %v327
        %v338 = vpop.f32.mrf.mxu0
        %v339 = vadd.f32 %v306, %v338
        %v340 = vpop.f32.mrf.mxu0
        %v341 = vadd.f32 %v306, %v340
        %342 = vdwg.mxu0
        %v343 = vmul.f32 %v339, 0.35355338
        %v344 = vmul.f32 %v341, 0.35355338
        %v345 = vpack.c.bf16 %v343, %v343
        %v346 = vpack.c.bf16 %v344, %v344
        %vm347 = vcmask 60416
        %348 = vst.msk [vmem:[%s280] sm:$0xf] %vm347, %v345
        %349 = vst.msk [vmem:[%s280 + $0x4] sm:$0xf] %vm347, %v346
        %v350 = vpack.c.bf16 %v339, %v339
        %v351 = vpack.c.bf16 %v341, %v341
        %354 = vrot.lane.b32.xlu0 %v350, 96
        %v355 = vpop.permute.xlu0 %354
        %356 = vrot.lane.b32.xlu0 %v351, 96
        %v357 = vpop.permute.xlu0 %356
        %360 = vst.msk [vmem:[%s286] sm:$0xf] %vm347, %v355
        %361 = vst.msk [vmem:[%s286 + $0x4] sm:$0xf] %vm347, %v357
        %362 = vrot.lane.b32.xlu0 %v350, 64
        %v363 = vpop.permute.xlu0 %362
        %364 = vrot.lane.b32.xlu0 %v351, 64
        %v365 = vpop.permute.xlu0 %364
        %368 = vst.msk [vmem:[%s292] sm:$0xf] %vm347, %v363
        %369 = vst.msk [vmem:[%s292 + $0x4] sm:$0xf] %vm347, %v365
        %372 = vrot.lane.b32.xlu0 %v345, 120
        %v373 = vpop.permute.xlu0 %372
        %374 = vrot.lane.b32.xlu0 %v346, 120
        %v375 = vpop.permute.xlu0 %374
        %s378 = scalar_lea.vmem %s280, 8 [#allocation6]
        %379 = vst.msk [vmem:[%s378] sm:$0xf] %vm347, %v373
        %380 = vst.msk [vmem:[%s378 + $0x4] sm:$0xf] %vm347, %v375
        %381 = vrot.lane.b32.xlu0 %v350, 88
        %v382 = vpop.permute.xlu0 %381
        %383 = vrot.lane.b32.xlu0 %v351, 88
        %v384 = vpop.permute.xlu0 %383
        %s387 = scalar_lea.vmem %s286, 8 [#allocation7]
        %388 = vst.msk [vmem:[%s387] sm:$0xf] %vm347, %v382
        %389 = vst.msk [vmem:[%s387 + $0x4] sm:$0xf] %vm347, %v384
        %390 = vrot.lane.b32.xlu0 %v350, 56
        %v391 = vpop.permute.xlu0 %390
        %392 = vrot.lane.b32.xlu0 %v351, 56
        %v393 = vpop.permute.xlu0 %392
        %s396 = scalar_lea.vmem %s292, 8 [#allocation8]
        %397 = vst.msk [vmem:[%s396] sm:$0xf] %vm347, %v391
        %398 = vst.msk [vmem:[%s396 + $0x4] sm:$0xf] %vm347, %v393
        %399 = vrot.lane.b32.xlu0 %v345, 112
        %v400 = vpop.permute.xlu0 %399
        %401 = vrot.lane.b32.xlu0 %v346, 112
        %v402 = vpop.permute.xlu0 %401
        %s405 = scalar_lea.vmem %s280, 16 [#allocation6]
        %406 = vst.msk [vmem:[%s405] sm:$0xf] %vm347, %v400
        %407 = vst.msk [vmem:[%s405 + $0x4] sm:$0xf] %vm347, %v402
        %408 = vrot.lane.b32.xlu0 %v350, 80
        %v409 = vpop.permute.xlu0 %408
        %410 = vrot.lane.b32.xlu0 %v351, 80
        %v411 = vpop.permute.xlu0 %410
        %s414 = scalar_lea.vmem %s286, 16 [#allocation7]
        %415 = vst.msk [vmem:[%s414] sm:$0xf] %vm347, %v409
        %416 = vst.msk [vmem:[%s414 + $0x4] sm:$0xf] %vm347, %v411
        %417 = vrot.lane.b32.xlu0 %v350, 48
        %v418 = vpop.permute.xlu0 %417
        %419 = vrot.lane.b32.xlu0 %v351, 48
        %v420 = vpop.permute.xlu0 %419
        %s423 = scalar_lea.vmem %s292, 16 [#allocation8]
        %424 = vst.msk [vmem:[%s423] sm:$0xf] %vm347, %v418
        %425 = vst.msk [vmem:[%s423 + $0x4] sm:$0xf] %vm347, %v420
        %426 = vrot.lane.b32.xlu0 %v345, 104
        %v427 = vpop.permute.xlu0 %426
        %428 = vrot.lane.b32.xlu0 %v346, 104
        %v429 = vpop.permute.xlu0 %428
        %s432 = scalar_lea.vmem %s280, 24 [#allocation6]
        %433 = vst.msk [vmem:[%s432] sm:$0xf] %vm347, %v427
        %434 = vst.msk [vmem:[%s432 + $0x4] sm:$0xf] %vm347, %v429
        %435 = vrot.lane.b32.xlu0 %v350, 72
        %v436 = vpop.permute.xlu0 %435
        %437 = vrot.lane.b32.xlu0 %v351, 72
        %v438 = vpop.permute.xlu0 %437
        %s441 = scalar_lea.vmem %s286, 24 [#allocation7]
        %442 = vst.msk [vmem:[%s441] sm:$0xf] %vm347, %v436
        %443 = vst.msk [vmem:[%s441 + $0x4] sm:$0xf] %vm347, %v438
        %444 = vrot.lane.b32.xlu0 %v350, 40
        %v445 = vpop.permute.xlu0 %444
        %446 = vrot.lane.b32.xlu0 %v351, 40
        %v447 = vpop.permute.xlu0 %446
        %s450 = scalar_lea.vmem %s292, 24 [#allocation8]
        %451 = vst.msk [vmem:[%s450] sm:$0xf] %vm347, %v445
        %452 = vst.msk [vmem:[%s450 + $0x4] sm:$0xf] %vm347, %v447
        %s453 = sand.u32 %s113, 1
        %s454 = sand.u32 %s113, 1
        %s455 = smul.addr %s454, 32
        %s456 = scalar_lea.vmem [#allocation6], %s455
        %s457 = sand.u32 %s141, 1
        %s458 = sand.u32 %s141, 1
        %s459 = smul.addr %s458, 32
        %s460 = scalar_lea.vmem [#allocation7], %s459
        %s461 = sand.u32 %s169, 1
        %s462 = sand.u32 %s169, 1
        %s463 = smul.addr %s462, 32
        %s464 = scalar_lea.vmem [#allocation8], %s463
        // Predicated region
        $region41: #{tpu_custom_call.1} parent=31 // pred_check
          %p465 = pneg %p123
        $region42: #{tpu_custom_call.1} parent=31 // pred_check_branch
          %467 = sbr.rel (%p465) target = $region44
        $region43: #{tpu_custom_call.1} parent=31 // pred_region
          %s468 = smul.u32 2, %s26
          %s469 = smul.addr %s25, 16
          %s470 = sadd.s32 %s468, %s469
          %s471 = smul.addr %s470, 4
          %s472 = scalar_lea.vmem %s3, %s471
          // Predicated region
          $region45: #{tpu_custom_call.1} parent=43 // pred_check
            _
          $region46: #{tpu_custom_call.1} parent=43 // pred_check_branch
            %474 = sbr.rel (0) target = $region48
          $region47: #{tpu_custom_call.1} parent=43 // pred_region
            // Predicated region
            $region49: #{tpu_custom_call.1} parent=47 // pred_check
              _
            $region50: #{tpu_custom_call.1} parent=47 // pred_check_branch
              %476 = sbr.rel target = $region52
            $region51: #{tpu_custom_call.1} parent=47 // pred_region
              // Predicated region
              $region64: #{tpu_custom_call.1} parent=51 // pred_check
                _
              $region65: #{tpu_custom_call.1} parent=51 // pred_check_branch
                %506 = sbr.rel (0) target = $region67
              $region66: #{tpu_custom_call.1} parent=51 // pred_region
                loop: start=0, step=1, limit=1
                $region68: #{tpu_custom_call.1} parent=66 // loop_pre_header
                  _
                $region69: #{tpu_custom_call.1} parent=66 // loop_header
                  %s508 = sphi 0, %s512
                  %p509 = scmp.ge.s32.totalorder %s508, 1
                  %s513 = sphi %s456, %s456
                  %s514 = sphi %s472, %s472
                $region70: #{tpu_custom_call.1} parent=66 // loop_header_branch
                  %511 = sbr.rel (%p509) target = $region74
                $region71: #{tpu_custom_call.1} parent=66 // loop_body
                  _
                $region72: #{tpu_custom_call.1} parent=66 // loop_footer
                  %s512 = sadd.s32 1, %s508
                $region73: #{tpu_custom_call.1} parent=66 // loop_footer_branch
                  %507 = sbr.rel target = $region69
                $region74: #{tpu_custom_call.1} parent=66 // loop_exit
                  _
                %s516 = ssub.s32 16, 1
                loop: start=0, step=1, limit=1
                $region75: #{tpu_custom_call.1} parent=66 // loop_pre_header
                  _
                $region76: #{tpu_custom_call.1} parent=66 // loop_header
                  %s518 = sphi 0, %s522
                  %p519 = scmp.ge.s32.totalorder %s518, 1
                  %s523 = sphi %s456, %s456
                  %s524 = sphi %s472, %s472
                $region77: #{tpu_custom_call.1} parent=66 // loop_header_branch
                  %521 = sbr.rel (%p519) target = $region81
                $region78: #{tpu_custom_call.1} parent=66 // loop_body
                  %v525 = vld [vmem:[%s523] sm:%s516]
                  %526 = vst [vmem:[%s524] sm:%s516] %v525
                  %v527 = vld [vmem:[%s523 + $0x4] sm:%s516]
                  %528 = vst [vmem:[%s524 + $0x4] sm:%s516] %v527
                  %v529 = vld [vmem:[%s523 + $0x8] sm:%s516]
                  %530 = vst [vmem:[%s524 + $0x10] sm:%s516] %v529
                  %v531 = vld [vmem:[%s523 + $0xc] sm:%s516]
                  %532 = vst [vmem:[%s524 + $0x14] sm:%s516] %v531
                  %v533 = vld [vmem:[%s523 + $0x10] sm:%s516]
                  %534 = vst [vmem:[%s524 + $0x20] sm:%s516] %v533
                  %v535 = vld [vmem:[%s523 + $0x14] sm:%s516]
                  %536 = vst [vmem:[%s524 + $0x24] sm:%s516] %v535
                  %v537 = vld [vmem:[%s523 + $0x18] sm:%s516]
                  %538 = vst [vmem:[%s524 + $0x30] sm:%s516] %v537
                  %v539 = vld [vmem:[%s523 + $0x1c] sm:%s516]
                  %540 = vst [vmem:[%s524 + $0x34] sm:%s516] %v539
                $region79: #{tpu_custom_call.1} parent=66 // loop_footer
                  %s522 = sadd.s32 1, %s518
                $region80: #{tpu_custom_call.1} parent=66 // loop_footer_branch
                  %517 = sbr.rel target = $region76
                $region81: #{tpu_custom_call.1} parent=66 // loop_exit
                  _
              $region67: #{tpu_custom_call.1} parent=51 // pred_fallthru
                _
            $region52: #{tpu_custom_call.1} parent=47 // pred_fallthru
              _
            // Predicated region
            $region53: #{tpu_custom_call.1} parent=47 // pred_check
              _
            $region54: #{tpu_custom_call.1} parent=47 // pred_check_branch
              %478 = sbr.rel (0) target = $region56
            $region55: #{tpu_custom_call.1} parent=47 // pred_region
              %s480 = ssub.s32 16, 1
              loop: start=0, step=1, limit=1
              $region57: #{tpu_custom_call.1} parent=55 // loop_pre_header
                _
              $region58: #{tpu_custom_call.1} parent=55 // loop_header
                %s482 = sphi 0, %s486
                %p483 = scmp.ge.s32.totalorder %s482, 1
                %s487 = sphi %s456, %s456
                %s488 = sphi %s472, %s472
              $region59: #{tpu_custom_call.1} parent=55 // loop_header_branch
                %485 = sbr.rel (%p483) target = $region63
              $region60: #{tpu_custom_call.1} parent=55 // loop_body
                %v489 = vld [vmem:[%s487] sm:%s480]
                %490 = vst [vmem:[%s488] sm:%s480] %v489
                %v491 = vld [vmem:[%s487 + $0x4] sm:%s480]
                %492 = vst [vmem:[%s488 + $0x4] sm:%s480] %v491
                %v493 = vld [vmem:[%s487 + $0x8] sm:%s480]
                %494 = vst [vmem:[%s488 + $0x10] sm:%s480] %v493
                %v495 = vld [vmem:[%s487 + $0xc] sm:%s480]
                %496 = vst [vmem:[%s488 + $0x14] sm:%s480] %v495
                %v497 = vld [vmem:[%s487 + $0x10] sm:%s480]
                %498 = vst [vmem:[%s488 + $0x20] sm:%s480] %v497
                %v499 = vld [vmem:[%s487 + $0x14] sm:%s480]
                %500 = vst [vmem:[%s488 + $0x24] sm:%s480] %v499
                %v501 = vld [vmem:[%s487 + $0x18] sm:%s480]
                %502 = vst [vmem:[%s488 + $0x30] sm:%s480] %v501
                %v503 = vld [vmem:[%s487 + $0x1c] sm:%s480]
                %504 = vst [vmem:[%s488 + $0x34] sm:%s480] %v503
              $region61: #{tpu_custom_call.1} parent=55 // loop_footer
                %s486 = sadd.s32 1, %s482
              $region62: #{tpu_custom_call.1} parent=55 // loop_footer_branch
                %481 = sbr.rel target = $region58
              $region63: #{tpu_custom_call.1} parent=55 // loop_exit
                _
            $region56: #{tpu_custom_call.1} parent=47 // pred_fallthru
              _
          $region48: #{tpu_custom_call.1} parent=43 // pred_fallthru
            _
          %541 = vnop
        $region44: #{tpu_custom_call.1} parent=31 // pred_fallthru
          _
        // Predicated region
        $region82: #{tpu_custom_call.1} parent=31 // pred_check
          %p542 = pneg %p151
        $region83: #{tpu_custom_call.1} parent=31 // pred_check_branch
          %544 = sbr.rel (%p542) target = $region85
        $region84: #{tpu_custom_call.1} parent=31 // pred_region
          %s545 = smul.u32 2, %s26
          %s546 = smul.addr %s25, 16
          %s547 = sadd.s32 %s545, %s546
          %s548 = smul.addr %s547, 4
          %s549 = scalar_lea.vmem %s4, %s548
          // Predicated region
          $region86: #{tpu_custom_call.1} parent=84 // pred_check
            _
          $region87: #{tpu_custom_call.1} parent=84 // pred_check_branch
            %551 = sbr.rel (0) target = $region89
          $region88: #{tpu_custom_call.1} parent=84 // pred_region
            // Predicated region
            $region90: #{tpu_custom_call.1} parent=88 // pred_check
              _
            $region91: #{tpu_custom_call.1} parent=88 // pred_check_branch
              %553 = sbr.rel target = $region93
            $region92: #{tpu_custom_call.1} parent=88 // pred_region
              // Predicated region
              $region105: #{tpu_custom_call.1} parent=92 // pred_check
                _
              $region106: #{tpu_custom_call.1} parent=92 // pred_check_branch
                %583 = sbr.rel (0) target = $region108
              $region107: #{tpu_custom_call.1} parent=92 // pred_region
                loop: start=0, step=1, limit=1
                $region109: #{tpu_custom_call.1} parent=107 // loop_pre_header
                  _
                $region110: #{tpu_custom_call.1} parent=107 // loop_header
                  %s585 = sphi 0, %s589
                  %p586 = scmp.ge.s32.totalorder %s585, 1
                  %s590 = sphi %s460, %s460
                  %s591 = sphi %s549, %s549
                $region111: #{tpu_custom_call.1} parent=107 // loop_header_branch
                  %588 = sbr.rel (%p586) target = $region115
                $region112: #{tpu_custom_call.1} parent=107 // loop_body
                  _
                $region113: #{tpu_custom_call.1} parent=107 // loop_footer
                  %s589 = sadd.s32 1, %s585
                $region114: #{tpu_custom_call.1} parent=107 // loop_footer_branch
                  %584 = sbr.rel target = $region110
                $region115: #{tpu_custom_call.1} parent=107 // loop_exit
                  _
                %s593 = ssub.s32 16, 1
                loop: start=0, step=1, limit=1
                $region116: #{tpu_custom_call.1} parent=107 // loop_pre_header
                  _
                $region117: #{tpu_custom_call.1} parent=107 // loop_header
                  %s595 = sphi 0, %s599
                  %p596 = scmp.ge.s32.totalorder %s595, 1
                  %s600 = sphi %s460, %s460
                  %s601 = sphi %s549, %s549
                $region118: #{tpu_custom_call.1} parent=107 // loop_header_branch
                  %598 = sbr.rel (%p596) target = $region122
                $region119: #{tpu_custom_call.1} parent=107 // loop_body
                  %v602 = vld [vmem:[%s600] sm:%s593]
                  %603 = vst [vmem:[%s601] sm:%s593] %v602
                  %v604 = vld [vmem:[%s600 + $0x4] sm:%s593]
                  %605 = vst [vmem:[%s601 + $0x4] sm:%s593] %v604
                  %v606 = vld [vmem:[%s600 + $0x8] sm:%s593]
                  %607 = vst [vmem:[%s601 + $0x10] sm:%s593] %v606
                  %v608 = vld [vmem:[%s600 + $0xc] sm:%s593]
                  %609 = vst [vmem:[%s601 + $0x14] sm:%s593] %v608
                  %v610 = vld [vmem:[%s600 + $0x10] sm:%s593]
                  %611 = vst [vmem:[%s601 + $0x20] sm:%s593] %v610
                  %v612 = vld [vmem:[%s600 + $0x14] sm:%s593]
                  %613 = vst [vmem:[%s601 + $0x24] sm:%s593] %v612
                  %v614 = vld [vmem:[%s600 + $0x18] sm:%s593]
                  %615 = vst [vmem:[%s601 + $0x30] sm:%s593] %v614
                  %v616 = vld [vmem:[%s600 + $0x1c] sm:%s593]
                  %617 = vst [vmem:[%s601 + $0x34] sm:%s593] %v616
                $region120: #{tpu_custom_call.1} parent=107 // loop_footer
                  %s599 = sadd.s32 1, %s595
                $region121: #{tpu_custom_call.1} parent=107 // loop_footer_branch
                  %594 = sbr.rel target = $region117
                $region122: #{tpu_custom_call.1} parent=107 // loop_exit
                  _
              $region108: #{tpu_custom_call.1} parent=92 // pred_fallthru
                _
            $region93: #{tpu_custom_call.1} parent=88 // pred_fallthru
              _
            // Predicated region
            $region94: #{tpu_custom_call.1} parent=88 // pred_check
              _
            $region95: #{tpu_custom_call.1} parent=88 // pred_check_branch
              %555 = sbr.rel (0) target = $region97
            $region96: #{tpu_custom_call.1} parent=88 // pred_region
              %s557 = ssub.s32 16, 1
              loop: start=0, step=1, limit=1
              $region98: #{tpu_custom_call.1} parent=96 // loop_pre_header
                _
              $region99: #{tpu_custom_call.1} parent=96 // loop_header
                %s559 = sphi 0, %s563
                %p560 = scmp.ge.s32.totalorder %s559, 1
                %s564 = sphi %s460, %s460
                %s565 = sphi %s549, %s549
              $region100: #{tpu_custom_call.1} parent=96 // loop_header_branch
                %562 = sbr.rel (%p560) target = $region104
              $region101: #{tpu_custom_call.1} parent=96 // loop_body
                %v566 = vld [vmem:[%s564] sm:%s557]
                %567 = vst [vmem:[%s565] sm:%s557] %v566
                %v568 = vld [vmem:[%s564 + $0x4] sm:%s557]
                %569 = vst [vmem:[%s565 + $0x4] sm:%s557] %v568
                %v570 = vld [vmem:[%s564 + $0x8] sm:%s557]
                %571 = vst [vmem:[%s565 + $0x10] sm:%s557] %v570
                %v572 = vld [vmem:[%s564 + $0xc] sm:%s557]
                %573 = vst [vmem:[%s565 + $0x14] sm:%s557] %v572
                %v574 = vld [vmem:[%s564 + $0x10] sm:%s557]
                %575 = vst [vmem:[%s565 + $0x20] sm:%s557] %v574
                %v576 = vld [vmem:[%s564 + $0x14] sm:%s557]
                %577 = vst [vmem:[%s565 + $0x24] sm:%s557] %v576
                %v578 = vld [vmem:[%s564 + $0x18] sm:%s557]
                %579 = vst [vmem:[%s565 + $0x30] sm:%s557] %v578
                %v580 = vld [vmem:[%s564 + $0x1c] sm:%s557]
                %581 = vst [vmem:[%s565 + $0x34] sm:%s557] %v580
              $region102: #{tpu_custom_call.1} parent=96 // loop_footer
                %s563 = sadd.s32 1, %s559
              $region103: #{tpu_custom_call.1} parent=96 // loop_footer_branch
                %558 = sbr.rel target = $region99
              $region104: #{tpu_custom_call.1} parent=96 // loop_exit
                _
            $region97: #{tpu_custom_call.1} parent=88 // pred_fallthru
              _
          $region89: #{tpu_custom_call.1} parent=84 // pred_fallthru
            _
          %618 = vnop
        $region85: #{tpu_custom_call.1} parent=31 // pred_fallthru
          _
        // Predicated region
        $region123: #{tpu_custom_call.1} parent=31 // pred_check
          %p619 = pneg %p179
        $region124: #{tpu_custom_call.1} parent=31 // pred_check_branch
          %621 = sbr.rel (%p619) target = $region126
        $region125: #{tpu_custom_call.1} parent=31 // pred_region
          %s622 = smul.u32 2, %s26
          %s623 = smul.addr %s25, 16
          %s624 = sadd.s32 %s622, %s623
          %s625 = smul.addr %s624, 4
          %s626 = scalar_lea.vmem %s5, %s625
          // Predicated region
          $region127: #{tpu_custom_call.1} parent=125 // pred_check
            _
          $region128: #{tpu_custom_call.1} parent=125 // pred_check_branch
            %628 = sbr.rel (0) target = $region130
          $region129: #{tpu_custom_call.1} parent=125 // pred_region
            // Predicated region
            $region131: #{tpu_custom_call.1} parent=129 // pred_check
              _
            $region132: #{tpu_custom_call.1} parent=129 // pred_check_branch
              %630 = sbr.rel target = $region134
            $region133: #{tpu_custom_call.1} parent=129 // pred_region
              // Predicated region
              $region146: #{tpu_custom_call.1} parent=133 // pred_check
                _
              $region147: #{tpu_custom_call.1} parent=133 // pred_check_branch
                %660 = sbr.rel (0) target = $region149
              $region148: #{tpu_custom_call.1} parent=133 // pred_region
                loop: start=0, step=1, limit=1
                $region150: #{tpu_custom_call.1} parent=148 // loop_pre_header
                  _
                $region151: #{tpu_custom_call.1} parent=148 // loop_header
                  %s662 = sphi 0, %s666
                  %p663 = scmp.ge.s32.totalorder %s662, 1
                  %s667 = sphi %s464, %s464
                  %s668 = sphi %s626, %s626
                $region152: #{tpu_custom_call.1} parent=148 // loop_header_branch
                  %665 = sbr.rel (%p663) target = $region156
                $region153: #{tpu_custom_call.1} parent=148 // loop_body
                  _
                $region154: #{tpu_custom_call.1} parent=148 // loop_footer
                  %s666 = sadd.s32 1, %s662
                $region155: #{tpu_custom_call.1} parent=148 // loop_footer_branch
                  %661 = sbr.rel target = $region151
                $region156: #{tpu_custom_call.1} parent=148 // loop_exit
                  _
                %s670 = ssub.s32 16, 1
                loop: start=0, step=1, limit=1
                $region157: #{tpu_custom_call.1} parent=148 // loop_pre_header
                  _
                $region158: #{tpu_custom_call.1} parent=148 // loop_header
                  %s672 = sphi 0, %s676
                  %p673 = scmp.ge.s32.totalorder %s672, 1
                  %s677 = sphi %s464, %s464
                  %s678 = sphi %s626, %s626
                $region159: #{tpu_custom_call.1} parent=148 // loop_header_branch
                  %675 = sbr.rel (%p673) target = $region163
                $region160: #{tpu_custom_call.1} parent=148 // loop_body
                  %v679 = vld [vmem:[%s677] sm:%s670]
                  %680 = vst [vmem:[%s678] sm:%s670] %v679
                  %v681 = vld [vmem:[%s677 + $0x4] sm:%s670]
                  %682 = vst [vmem:[%s678 + $0x4] sm:%s670] %v681
                  %v683 = vld [vmem:[%s677 + $0x8] sm:%s670]
                  %684 = vst [vmem:[%s678 + $0x10] sm:%s670] %v683
                  %v685 = vld [vmem:[%s677 + $0xc] sm:%s670]
                  %686 = vst [vmem:[%s678 + $0x14] sm:%s670] %v685
                  %v687 = vld [vmem:[%s677 + $0x10] sm:%s670]
                  %688 = vst [vmem:[%s678 + $0x20] sm:%s670] %v687
                  %v689 = vld [vmem:[%s677 + $0x14] sm:%s670]
                  %690 = vst [vmem:[%s678 + $0x24] sm:%s670] %v689
                  %v691 = vld [vmem:[%s677 + $0x18] sm:%s670]
                  %692 = vst [vmem:[%s678 + $0x30] sm:%s670] %v691
                  %v693 = vld [vmem:[%s677 + $0x1c] sm:%s670]
                  %694 = vst [vmem:[%s678 + $0x34] sm:%s670] %v693
                $region161: #{tpu_custom_call.1} parent=148 // loop_footer
                  %s676 = sadd.s32 1, %s672
                $region162: #{tpu_custom_call.1} parent=148 // loop_footer_branch
                  %671 = sbr.rel target = $region158
                $region163: #{tpu_custom_call.1} parent=148 // loop_exit
                  _
              $region149: #{tpu_custom_call.1} parent=133 // pred_fallthru
                _
            $region134: #{tpu_custom_call.1} parent=129 // pred_fallthru
              _
            // Predicated region
            $region135: #{tpu_custom_call.1} parent=129 // pred_check
              _
            $region136: #{tpu_custom_call.1} parent=129 // pred_check_branch
              %632 = sbr.rel (0) target = $region138
            $region137: #{tpu_custom_call.1} parent=129 // pred_region
              %s634 = ssub.s32 16, 1
              loop: start=0, step=1, limit=1
              $region139: #{tpu_custom_call.1} parent=137 // loop_pre_header
                _
              $region140: #{tpu_custom_call.1} parent=137 // loop_header
                %s636 = sphi 0, %s640
                %p637 = scmp.ge.s32.totalorder %s636, 1
                %s641 = sphi %s464, %s464
                %s642 = sphi %s626, %s626
              $region141: #{tpu_custom_call.1} parent=137 // loop_header_branch
                %639 = sbr.rel (%p637) target = $region145
              $region142: #{tpu_custom_call.1} parent=137 // loop_body
                %v643 = vld [vmem:[%s641] sm:%s634]
                %644 = vst [vmem:[%s642] sm:%s634] %v643
                %v645 = vld [vmem:[%s641 + $0x4] sm:%s634]
                %646 = vst [vmem:[%s642 + $0x4] sm:%s634] %v645
                %v647 = vld [vmem:[%s641 + $0x8] sm:%s634]
                %648 = vst [vmem:[%s642 + $0x10] sm:%s634] %v647
                %v649 = vld [vmem:[%s641 + $0xc] sm:%s634]
                %650 = vst [vmem:[%s642 + $0x14] sm:%s634] %v649
                %v651 = vld [vmem:[%s641 + $0x10] sm:%s634]
                %652 = vst [vmem:[%s642 + $0x20] sm:%s634] %v651
                %v653 = vld [vmem:[%s641 + $0x14] sm:%s634]
                %654 = vst [vmem:[%s642 + $0x24] sm:%s634] %v653
                %v655 = vld [vmem:[%s641 + $0x18] sm:%s634]
                %656 = vst [vmem:[%s642 + $0x30] sm:%s634] %v655
                %v657 = vld [vmem:[%s641 + $0x1c] sm:%s634]
                %658 = vst [vmem:[%s642 + $0x34] sm:%s634] %v657
              $region143: #{tpu_custom_call.1} parent=137 // loop_footer
                %s640 = sadd.s32 1, %s636
              $region144: #{tpu_custom_call.1} parent=137 // loop_footer_branch
                %635 = sbr.rel target = $region140
              $region145: #{tpu_custom_call.1} parent=137 // loop_exit
                _
            $region138: #{tpu_custom_call.1} parent=129 // pred_fallthru
              _
          $region130: #{tpu_custom_call.1} parent=125 // pred_fallthru
            _
          %695 = vnop
        $region126: #{tpu_custom_call.1} parent=31 // pred_fallthru
          _
      $region32: #{tpu_custom_call.1} parent=5 // pred_fallthru
        _
      %p696 = scmp.le.s32.totalorder 2, %s16
      // Predicated region
      $region164: #{tpu_custom_call.1} parent=5 // pred_check
        %p697 = pneg %p696
      $region165: #{tpu_custom_call.1} parent=5 // pred_check_branch
        %699 = sbr.rel (%p697) target = $region167
      $region166: #{tpu_custom_call.1} parent=5 // pred_region
        %s700 = ssub.s32 %s16, 2
        // Predicated region
        $region168: #{tpu_custom_call.1} parent=166 // pred_check
          %p701 = pneg %p129
        $region169: #{tpu_custom_call.1} parent=166 // pred_check_branch
          %703 = sbr.rel (%p701) target = $region171
        $region170: #{tpu_custom_call.1} parent=166 // pred_region
          %s704 = sand.u32 %s114, 1
          %s705 = sand.u32 %s114, 1
          %s706 = smul.addr %s705, 32
          %s707 = scalar_lea.vmem [#allocation6], %s706
        $region171: #{tpu_custom_call.1} parent=166 // pred_fallthru
          _
        // Predicated region
        $region172: #{tpu_custom_call.1} parent=166 // pred_check
          %p708 = pneg %p157
        $region173: #{tpu_custom_call.1} parent=166 // pred_check_branch
          %710 = sbr.rel (%p708) target = $region175
        $region174: #{tpu_custom_call.1} parent=166 // pred_region
          %s711 = sand.u32 %s142, 1
          %s712 = sand.u32 %s142, 1
          %s713 = smul.addr %s712, 32
          %s714 = scalar_lea.vmem [#allocation7], %s713
        $region175: #{tpu_custom_call.1} parent=166 // pred_fallthru
          _
        // Predicated region
        $region176: #{tpu_custom_call.1} parent=166 // pred_check
          %p715 = pneg %p185
        $region177: #{tpu_custom_call.1} parent=166 // pred_check_branch
          %717 = sbr.rel (%p715) target = $region179
        $region178: #{tpu_custom_call.1} parent=166 // pred_region
          %s718 = sand.u32 %s170, 1
          %s719 = sand.u32 %s170, 1
          %s720 = smul.addr %s719, 32
          %s721 = scalar_lea.vmem [#allocation8], %s720
        $region179: #{tpu_custom_call.1} parent=166 // pred_fallthru
          _
      $region167: #{tpu_custom_call.1} parent=5 // pred_fallthru
        _
    $region6: #{tpu_custom_call.1} parent=1 // loop_footer
      %s20 = sadd.s32 1, %s16
    $region7: #{tpu_custom_call.1} parent=1 // loop_footer_branch
      %15 = sbr.rel target = $region3
    $region8: #{tpu_custom_call.1} parent=1 // loop_exit
      _
    %722 = vsyncpa [#allocation3], 1
    %s723 = scalar_lea.sflag [#allocation3], 1
    %724 = vsyncpa %s723, 1
    %725 = vsyncpa [#allocation5], 1

</llo_original>
